<compile_context>
chip_gen: v6e
topology: v6e:2x2x1
jax: 0.10.0
libtpu: 0.0.40
codegen_flags: <defaults>
</compile_context>

<pallas_src>
import functools

import numpy as np
import jax
import jax.numpy as jnp
from jax.experimental import pallas as pl
from jax.experimental.pallas import tpu as pltpu

# -----------------------------------------------------------------------------
# Small-but-structurally-faithful configuration.
# -----------------------------------------------------------------------------
MAX_CAV = 2
RECORD_LEN = [2, 1]            # static per-sample CAV counts (sum = total CAVs)
N_CAV = sum(RECORD_LEN)        # 3
BATCH = len(RECORD_LEN)        # 2

GRID_NY, GRID_NX = 16, 16
VOXEL_SIZE = (1.0, 1.0, 4.0)
PC_RANGE = (0.0, -8.0, -3.0, 16.0, 8.0, 1.0)
MAX_PTS = 8
PFN_OUT = 64

BB_LAYER_NUMS = [1, 1, 1]
BB_STRIDES = [2, 2, 2]
BB_FILTERS = [64, 128, 256]
BB_UP_STRIDES = [1, 2, 4]
BB_UP_FILTER = 128

SHRINK_DIM = 256
WINDOW_SIZE = 4
DIM_HEAD = 32
MLP_DIM = 256
DEPTH = 1
ANCHOR_NUM = 2
HEAD_PAD = 128                 # lane-dense padded width of fused cls+reg output
FUSE_HW = 8                    # spatial size entering the fusion encoder

BN_EPS = 1e-3
LN_EPS = 1e-5
NEG_MASK = -1e9                # additive mask value (window / agent masking)

_CP = pltpu.CompilerParams(dimension_semantics=("parallel",),
                           vmem_limit_bytes=32 * 1024 * 1024)


def _round_up(v, m):
    return ((v + m - 1) // m) * m


# -----------------------------------------------------------------------------
# Pallas kernels
# -----------------------------------------------------------------------------
def _linear_kernel(x_ref, w_ref, s_ref, b_ref, o_ref, *, relu):
    acc = jnp.dot(x_ref[...].astype(jnp.bfloat16),
                  w_ref[...].astype(jnp.bfloat16),
                  preferred_element_type=jnp.float32)
    acc = acc * s_ref[...] + b_ref[...]
    if relu:
        acc = jnp.maximum(acc, 0.0)
    o_ref[...] = acc.astype(o_ref.dtype)


def linear_pallas(x, w, scale=None, bias=None, relu=False,
                  out_dtype=jnp.float32):
    """y = act((x @ w) * scale + bias); always >= 2 row tiles (v7x megacore)."""
    M, K = x.shape
    N = w.shape[1]
    if scale is None:
        scale = jnp.ones((N,), jnp.float32)
    if bias is None:
        bias = jnp.zeros((N,), jnp.float32)
    ntiles = 2
    TM = _round_up(pl.cdiv(M, ntiles), 8)
    Mp = TM * ntiles
    xp = x if Mp == M else jnp.pad(x, ((0, Mp - M), (0, 0)))
    out = pl.pallas_call(
        functools.partial(_linear_kernel, relu=relu),
        out_shape=jax.ShapeDtypeStruct((Mp, N), out_dtype),
        grid=(ntiles,),
        in_specs=[pl.BlockSpec((TM, K), lambda i: (i, 0)),
                  pl.BlockSpec((K, N), lambda i: (0, 0)),
                  pl.BlockSpec((1, N), lambda i: (0, 0)),
                  pl.BlockSpec((1, N), lambda i: (0, 0))],
        out_specs=pl.BlockSpec((TM, N), lambda i: (i, 0)),
        compiler_params=_CP,
    )(xp, w, scale.reshape(1, N), bias.reshape(1, N))
    return out if Mp == M else out[:M]


def _conv3x3_kernel(x_ref, w_ref, s_ref, b_ref, o_ref, *, relu):
    """Direct stride-1 3x3 conv: 9 shifted-slice matmuls accumulated in VMEM."""
    _, Hp, Wp, Cin = x_ref.shape
    _, Ho, Wo, Cout = o_ref.shape
    x = x_ref[0]                                        # (Hp, Wp, Cin)
    acc = jnp.zeros((Ho, Wo, Cout), jnp.float32)
    for di in range(3):
        for dj in range(3):
            patch = x[di:di + Ho, dj:dj + Wo, :].astype(jnp.bfloat16)
            acc = acc + jax.lax.dot_general(
                patch, w_ref[di * 3 + dj], (((2,), (0,)), ((), ())),
                preferred_element_type=jnp.float32)
    acc = acc * s_ref[...].reshape(1, 1, Cout) + b_ref[...].reshape(1, 1, Cout)
    if relu:
        acc = jnp.maximum(acc, 0.0)
    o_ref[...] = acc.reshape(1, Ho, Wo, Cout).astype(o_ref.dtype)


def conv3x3_s1_pallas(x, p, relu=True, out_dtype=jnp.bfloat16):
    """Stride-1 3x3 conv + folded BN (or bias) + ReLU; grid over CAVs."""
    N, H, W, Cin = x.shape
    Cout = p['w'].shape[-1]
    scale = p.get('scale')
    shift = p.get('shift', p.get('bias'))
    if scale is None:
        scale = jnp.ones((Cout,), jnp.float32)
    if shift is None:
        shift = jnp.zeros((Cout,), jnp.float32)
    xp = jnp.pad(x, ((0, 0), (1, 1), (1, 1), (0, 0)))
    Hp, Wp = H + 2, W + 2
    return pl.pallas_call(
        functools.partial(_conv3x3_kernel, relu=relu),
        out_shape=jax.ShapeDtypeStruct((N, H, W, Cout), out_dtype),
        grid=(N,),
        in_specs=[pl.BlockSpec((1, Hp, Wp, Cin), lambda n: (n, 0, 0, 0)),
                  pl.BlockSpec((9, Cin, Cout), lambda n: (0, 0, 0)),
                  pl.BlockSpec((1, Cout), lambda n: (0, 0)),
                  pl.BlockSpec((1, Cout), lambda n: (0, 0))],
        out_specs=pl.BlockSpec((1, H, W, Cout), lambda n: (n, 0, 0, 0)),
        compiler_params=_CP,
    )(xp, p['w'], scale.reshape(1, Cout), shift.reshape(1, Cout))


def _pfn_kernel(x_ref, w_ref, s_ref, b_ref, o_ref):
    """Packed (lidar|radar) PFN layer: 2-D matmul + BN + ReLU + max over pts."""
    TV, P, F = x_ref.shape
    C = o_ref.shape[-1]
    h = jnp.dot(x_ref[...].reshape(TV * P, F).astype(jnp.bfloat16),
                w_ref[...],
                preferred_element_type=jnp.float32)          # (TV*P, C)
    h = jnp.maximum(h * s_ref[...] + b_ref[...], 0.0)
    o_ref[...] = jnp.max(h.reshape(TV, P, C), axis=1).astype(o_ref.dtype)


def pfn_packed_pallas(feats_l, feats_r, pp):
    """Lidar + radar PFNs fused into ONE lane-dense (128-wide) call."""
    Nl, P, F = feats_l.shape
    Nr = feats_r.shape[0]
    C = PFN_OUT
    ntiles = 2
    TV = _round_up(pl.cdiv(max(Nl, Nr), ntiles), 8)
    Nvp = TV * ntiles
    fl = jnp.pad(feats_l, ((0, Nvp - Nl), (0, 0), (0, 0)))
    fr = jnp.pad(feats_r, ((0, Nvp - Nr), (0, 0), (0, 0)))
    packed = jnp.concatenate([fl, fr], axis=-1)              # (Nvp, P, 2F)
    out = pl.pallas_call(
        _pfn_kernel,
        out_shape=jax.ShapeDtypeStruct((Nvp, 2 * C), jnp.bfloat16),
        grid=(ntiles,),
        in_specs=[pl.BlockSpec((TV, P, 2 * F), lambda i: (i, 0, 0)),
                  pl.BlockSpec((2 * F, 2 * C), lambda i: (0, 0)),
                  pl.BlockSpec((1, 2 * C), lambda i: (0, 0)),
                  pl.BlockSpec((1, 2 * C), lambda i: (0, 0))],
        out_specs=pl.BlockSpec((TV, 2 * C), lambda i: (i, 0)),
        compiler_params=_CP,
    )(packed, pp['w'], pp['scale'].reshape(1, 2 * C),
      pp['shift'].reshape(1, 2 * C))
    return out[:Nl, :C], out[:Nr, C:]


def _attn_ffn_stage(x2, bias, ag, ab, wq3, wkvT, wout, fg, fb, w1, b1, w2, b2,
                    heads, dh):
    """One (pre-LN attention + residual) + (pre-LN FFN + residual) stage.

    Window structure / rel-pos bias / agent mask are all inside `bias`
    (heads, M, M); out-of-window pairs carry -1e9 so the full-sequence softmax
    reproduces the windowed attention exactly.
    """
    M, D = x2.shape

    # ---------------- pre-LN multi-head attention ----------------
    mu = jnp.mean(x2, axis=-1, keepdims=True)
    var = jnp.mean(jnp.square(x2 - mu), axis=-1, keepdims=True)
    y = ((x2 - mu) * jax.lax.rsqrt(var + LN_EPS) * ag + ab).astype(jnp.bfloat16)

    # q in head-batched (h, M, dh) layout (softmax scale folded into wq3).
    yb = jnp.broadcast_to(y[None, :, :], (heads, M, D))
    q3 = jax.lax.dot_general(yb, wq3, (((2,), (1,)), ((0,), (0,))),
                             preferred_element_type=jnp.float32)   # (h, M, dh)
    # k/v in transposed (h, dh, M) layout from one full-width NT matmul.
    kvT = jax.lax.dot_general(wkvT, y, (((1,), (1,)), ((), ())),
                              preferred_element_type=jnp.float32)  # (2D, M)
    kvT = kvT.reshape(2 * heads, dh, M)
    kT = kvT[:heads].astype(jnp.bfloat16)
    vT = kvT[heads:].astype(jnp.bfloat16)

    sim = jax.lax.dot_general(q3.astype(jnp.bfloat16), kT,
                              (((2,), (1,)), ((0,), (0,))),
                              preferred_element_type=jnp.float32)  # (h, M, M)
    sim = sim + bias
    sim = sim - jnp.max(sim, axis=-1, keepdims=True)
    e = jnp.exp(sim)
    p = (e * pl.reciprocal(jnp.sum(e, axis=-1, keepdims=True), approx=True)
         ).astype(jnp.bfloat16)
    ctxT = jax.lax.dot_general(vT, p, (((2,), (2,)), ((0,), (0,))),
                               preferred_element_type=jnp.float32)  # (h, dh, M)
    # single K=256 output projection (no per-head accumulation)
    attn = jax.lax.dot_general(ctxT.reshape(heads * dh, M).astype(jnp.bfloat16),
                               wout, (((0,), (0,)), ((), ())),
                               preferred_element_type=jnp.float32)  # (M, D)
    x2 = x2 + attn

    # ---------------- pre-LN FeedForward ----------------
    mu2 = jnp.mean(x2, axis=-1, keepdims=True)
    var2 = jnp.mean(jnp.square(x2 - mu2), axis=-1, keepdims=True)
    y2 = ((x2 - mu2) * jax.lax.rsqrt(var2 + LN_EPS) * fg + fb
          ).astype(jnp.bfloat16)
    h1 = jnp.dot(y2, w1, preferred_element_type=jnp.float32) + b1
    # TODO(synk): PyTorch nn.GELU is exact (erf); tanh approximation used here
    # for Mosaic-safe lowering.
    h1 = jax.nn.gelu(h1, approximate=True).astype(jnp.bfloat16)
    o = jnp.dot(h1, w2, preferred_element_type=jnp.float32) + b2
    return x2 + o


def _fusion_block_kernel(x_ref, bias_ref, ag_ref, ab_ref, wq3_ref, wkvT_ref,
                         wout_ref, fg_ref, fb_ref, w1_ref, b1_ref, w2_ref,
                         b2_ref, o_ref, *, heads, dim_head):
    """Fused SwapFusion block: window stage (s=0) + grid stage (s=1)."""
    shp = x_ref.shape                                   # (1, L, H, W, D)
    D = shp[-1]
    M = shp[1] * shp[2] * shp[3]
    x2 = x_ref[...].astype(jnp.float32).reshape(M, D)
    for s in range(2):
        x2 = _attn_ffn_stage(
            x2, bias_ref[s, 0], ag_ref[s], ab_ref[s], wq3_ref[s], wkvT_ref[s],
            wout_ref[s], fg_ref[s], fb_ref[s], w1_ref[s], b1_ref[s],
            w2_ref[s], b2_ref[s], heads=heads, dh=dim_head)
    o_ref[...] = x2.reshape(shp).astype(o_ref.dtype)


def fusion_block_pallas(x, bias_full, blk):
    """One fused SwapFusion block; grid over batch (v7x uses both TCs)."""
    B, L, H, W, D = x.shape
    heads = D // DIM_HEAD
    M = L * H * W
    MLP = blk['w1'].shape[-1]
    return pl.pallas_call(
        functools.partial(_fusion_block_kernel, heads=heads, dim_head=DIM_HEAD),
        out_shape=jax.ShapeDtypeStruct((B, L, H, W, D), jnp.float32),
        grid=(B,),
        in_specs=[
            pl.BlockSpec((1, L, H, W, D), lambda b: (b, 0, 0, 0, 0)),
            pl.BlockSpec((2, 1, heads, M, M), lambda b: (0, b, 0, 0, 0)),
            pl.BlockSpec((2, 1, D), lambda b: (0, 0, 0)),
            pl.BlockSpec((2, 1, D), lambda b: (0, 0, 0)),
            pl.BlockSpec((2, heads, D, DIM_HEAD), lambda b: (0, 0, 0, 0)),
            pl.BlockSpec((2, 2 * D, D), lambda b: (0, 0, 0)),
            pl.BlockSpec((2, D, D), lambda b: (0, 0, 0)),
            pl.BlockSpec((2, 1, D), lambda b: (0, 0, 0)),
            pl.BlockSpec((2, 1, D), lambda b: (0, 0, 0)),
            pl.BlockSpec((2, D, MLP), lambda b: (0, 0, 0)),
            pl.BlockSpec((2, 1, MLP), lambda b: (0, 0, 0)),
            pl.BlockSpec((2, MLP, D), lambda b: (0, 0, 0)),
            pl.BlockSpec((2, 1, D), lambda b: (0, 0, 0)),
        ],
        out_specs=pl.BlockSpec((1, L, H, W, D), lambda b: (b, 0, 0, 0, 0)),
        compiler_params=_CP,
    )(x, bias_full, blk['a_ln_g'], blk['a_ln_b'], blk['wq3'], blk['wkvT'],
      blk['wout'], blk['f_ln_g'], blk['f_ln_b'], blk['w1'], blk['b1'],
      blk['w2'], blk['b2'])


def _head_kernel(x_ref, g_ref, b_ref, wm_ref, bm_ref, wh_ref, bh_ref, o_ref):
    """Fused mlp_head (LN + Linear) + cls/reg 1x1 heads (lane-dense output)."""
    x = x_ref[...]
    mu = jnp.mean(x, axis=-1, keepdims=True)
    var = jnp.mean(jnp.square(x - mu), axis=-1, keepdims=True)
    y = (x - mu) * jax.lax.rsqrt(var + LN_EPS) * g_ref[...] + b_ref[...]
    f = jnp.dot(y.astype(jnp.bfloat16), wm_ref[...],
                preferred_element_type=jnp.float32) + bm_ref[...]
    o = jnp.dot(f.astype(jnp.bfloat16), wh_ref[...],
                preferred_element_type=jnp.float32) + bh_ref[...]
    o_ref[...] = o.astype(o_ref.dtype)


def head_pallas(x, p):
    M, D = x.shape
    Dh = p['wm'].shape[1]
    N = p['whr'].shape[1]
    ntiles = 2
    TM = _round_up(pl.cdiv(M, ntiles), 8)
    Mp = TM * ntiles
    xp = x if Mp == M else jnp.pad(x, ((0, Mp - M), (0, 0)))
    out = pl.pallas_call(
        _head_kernel,
        out_shape=jax.ShapeDtypeStruct((Mp, N), jnp.float32),
        grid=(ntiles,),
        in_specs=[pl.BlockSpec((TM, D), lambda i: (i, 0)),
                  pl.BlockSpec((1, D), lambda i: (0, 0)),
                  pl.BlockSpec((1, D), lambda i: (0, 0)),
                  pl.BlockSpec((D, Dh), lambda i: (0, 0)),
                  pl.BlockSpec((1, Dh), lambda i: (0, 0)),
                  pl.BlockSpec((Dh, N), lambda i: (0, 0)),
                  pl.BlockSpec((1, N), lambda i: (0, 0))],
        out_specs=pl.BlockSpec((TM, N), lambda i: (i, 0)),
        compiler_params=_CP,
    )(xp, p['ln_g'].reshape(1, D), p['ln_b'].reshape(1, D),
      p['wm'], p['bm'].reshape(1, Dh), p['whr'], p['bhr'].reshape(1, N))
    return out[:M]


# -----------------------------------------------------------------------------
# Conv glue for stride-2 convs / deconvs
# -----------------------------------------------------------------------------
def im2col(x, k, stride, pad):
    # TODO(synk): stride-2 3x3 convs keep a small bf16 im2col in XLA (the
    # strided patch extraction has no low-risk in-kernel Mosaic equivalent);
    # stride-1 convs use the direct Pallas conv above.
    N, H, W, C = x.shape
    xp = jnp.pad(x, ((0, 0), (pad, pad), (pad, pad), (0, 0)))
    Ho = (H + 2 * pad - k) // stride + 1
    Wo = (W + 2 * pad - k) // stride + 1
    cols = []
    for i in range(k):
        for j in range(k):
            cols.append(xp[:, i:i + stride * (Ho - 1) + 1:stride,
                           j:j + stride * (Wo - 1) + 1:stride, :])
    return jnp.concatenate(cols, axis=-1), Ho, Wo


def conv3x3_s2_pallas(x, p, relu=True):
    patches, Ho, Wo = im2col(x, 3, 2, 1)
    N = x.shape[0]
    K = patches.shape[-1]
    y = linear_pallas(patches.reshape(-1, K), p['w'], p.get('scale'),
                      p.get('shift', p.get('bias')), relu=relu,
                      out_dtype=jnp.bfloat16)
    return y.reshape(N, Ho, Wo, -1)


def deconv_pallas(x, p):
    # ConvTranspose2d(kernel=s, stride=s) + BN + ReLU (BN folded into kernel).
    N, H, W, Cin = x.shape
    s = p['stride']
    y = linear_pallas(x.reshape(-1, Cin), p['w'], p['scale'], p['shift'],
                      relu=True, out_dtype=jnp.bfloat16)
    y = y.reshape(N, H, W, BB_UP_FILTER, s, s).transpose(0, 1, 4, 2, 5, 3)
    return y.reshape(N, H * s, W * s, BB_UP_FILTER)


# -----------------------------------------------------------------------------
# Module pieces
# -----------------------------------------------------------------------------
def pillar_features(vf, coords, npts):
    """PillarVFE point-feature augmentation (glue); PFN layer runs in Pallas."""
    Nv, P, _ = vf.shape
    pts_mask = (jnp.arange(P)[None, :] < npts[:, None]).astype(jnp.float32)
    vf = vf * pts_mask[..., None]
    pm = jnp.sum(vf[:, :, :3], axis=1, keepdims=True) / \
        npts[:, None, None].astype(jnp.float32)
    f_cluster = vf[:, :, :3] - pm
    vx, vy, vz = VOXEL_SIZE
    x_off = vx / 2 + PC_RANGE[0]
    y_off = vy / 2 + PC_RANGE[1]
    z_off = vz / 2 + PC_RANGE[2]
    cx = coords[:, 3].astype(jnp.float32)[:, None] * vx + x_off
    cy = coords[:, 2].astype(jnp.float32)[:, None] * vy + y_off
    cz = coords[:, 1].astype(jnp.float32)[:, None] * vz + z_off
    f_center = jnp.stack([vf[:, :, 0] - cx, vf[:, :, 1] - cy, vf[:, :, 2] - cz],
                         axis=-1)
    feats = jnp.concatenate([vf, f_cluster, f_center], axis=-1)   # (Nv, P, 10)
    return feats * pts_mask[..., None]


def scatter_to_bev(pf, coords):
    # PointPillarScatter (data-dependent index scatter -> plain JAX glue).
    canvas = jnp.zeros((N_CAV, GRID_NY * GRID_NX, PFN_OUT), jnp.bfloat16)
    flat = coords[:, 2] * GRID_NX + coords[:, 3]
    canvas = canvas.at[coords[:, 0], flat].set(pf.astype(jnp.bfloat16))
    return canvas.reshape(N_CAV, GRID_NY, GRID_NX, PFN_OUT)


def backbone(blocks, x):
    ups = []
    for blk in blocks:
        x = conv3x3_s2_pallas(x, blk['convs'][0])
        for cp in blk['convs'][1:]:
            x = conv3x3_s1_pallas(x, cp)
        ups.append(deconv_pallas(x, blk['deconv']))
    return jnp.concatenate(ups, axis=-1)


def shrink(p, x):
    x = conv3x3_s1_pallas(x, p['c1'])
    x = conv3x3_s1_pallas(x, p['c2'])
    return x


def regroup(x2d):
    feats, mask = [], []
    start = 0
    for rl in RECORD_LEN:
        f = x2d[start:start + rl]
        start += rl
        padn = MAX_CAV - rl
        f = jnp.pad(f, ((0, padn), (0, 0), (0, 0), (0, 0)))
        feats.append(f)
        mask.append([1.0] * rl + [0.0] * padn)
    return jnp.stack(feats, 0), jnp.array(mask, jnp.float32)


def swap_fusion(params, x, mask_bl):
    """SwapFusionEncoder: depth x fused (window attn+FFN, grid attn+FFN)."""
    B, L, H, W, D = x.shape
    M = L * H * W
    # Fold the agent (CAV) key mask into the additive bias once per forward.
    agent_neg = (1.0 - mask_bl) * NEG_MASK                       # (B, L)
    key_neg = jnp.repeat(agent_neg, H * W, axis=1)               # (B, M)
    out = x
    for blk in params['fusion']:
        bias_full = blk['bias_static'][:, None] + \
            key_neg[None, :, None, None, :]                      # (2,B,h,M,M)
        out = fusion_block_pallas(out, bias_full, blk)
    # Reference mlp_head reduces with a plain mean over the agent dim
    # (including padded slots), matching opencood's SwapFusionEncoder.
    return jnp.mean(out, axis=1)                                 # (B, H, W, D)


def forward(params, lidar, radar):
    feats_l = pillar_features(*lidar)
    feats_r = pillar_features(*radar)
    pf_l, pf_r = pfn_packed_pallas(feats_l, feats_r, params['vfe_packed'])
    lidar_bev = scatter_to_bev(pf_l, lidar[1])
    radar_bev = scatter_to_bev(pf_r, radar[1])
    spatial = jnp.concatenate([lidar_bev, radar_bev], axis=-1)   # (3,16,16,128)

    x2d = backbone(params['backbone'], spatial)                  # (3,8,8,384)
    x2d = shrink(params['shrink'], x2d)                          # (3,8,8,256)
    # compression == 0 in this config -> NaiveCompressor skipped (as reference)

    reg, mask_bl = regroup(x2d)                                  # (2,2,8,8,256)
    xm = swap_fusion(params, reg, mask_bl)                       # (2,8,8,256)

    B, H, W, D = xm.shape
    out = head_pallas(xm.reshape(-1, D), params['head'])         # (B*H*W, 128)
    psm = out[:, :ANCHOR_NUM]
    rm = out[:, ANCHOR_NUM:ANCHOR_NUM + 7 * ANCHOR_NUM]
    psm = psm.reshape(B, H, W, ANCHOR_NUM).transpose(0, 3, 1, 2)
    rm = rm.reshape(B, H, W, 7 * ANCHOR_NUM).transpose(0, 3, 1, 2)
    return {'psm': psm, 'rm': rm}


# -----------------------------------------------------------------------------
# Deterministic parameter / data construction
# -----------------------------------------------------------------------------
class KeyGen:
    def __init__(self, key):
        self.key = key

    def __call__(self):
        self.key, sub = jax.random.split(self.key)
        return sub


def relative_position_index(agent_size, ws):
    coords = np.stack(np.meshgrid(np.arange(agent_size), np.arange(ws),
                                  np.arange(ws), indexing='ij'))
    cf = coords.reshape(3, -1)
    rel = (cf[:, :, None] - cf[:, None, :]).transpose(1, 2, 0).copy()
    rel[:, :, 0] += agent_size - 1
    rel[:, :, 1] += ws - 1
    rel[:, :, 2] += ws - 1
    rel[:, :, 0] *= (2 * ws - 1) * (2 * ws - 1)
    rel[:, :, 1] *= (2 * ws - 1)
    return rel.sum(-1).astype(np.int64)                          # (T, T)


def _window_maps(L, H, W, ws, mode):
    """Per full-token (l, r, c) window id and within-window token index."""
    nx, ny = H // ws, W // ws
    t = np.arange(L * H * W)
    l = t // (H * W)
    r = (t % (H * W)) // W
    c = t % W
    if mode == 'win':        # '(x w1) (y w2)'
        wi, wj, a, b = r // ws, c // ws, r % ws, c % ws
    else:                    # '(w1 x) (w2 y)'  -> grid attention
        wi, wj, a, b = r % nx, c % ny, r // nx, c // ny
    win = wi * ny + wj
    tok = l * (ws * ws) + a * ws + b
    return win, tok


def build_stage_bias(table, rel_idx, mode, L, H, W, ws):
    """(heads, M, M) additive bias: rel-pos bias + out-of-window -1e9 mask."""
    win, tok = _window_maps(L, H, W, ws, mode)
    full = table[rel_idx]                                # (T, T, heads)
    full = full[tok[:, None], tok[None, :]]              # (M, M, heads)
    same = (win[:, None] == win[None, :])[..., None]
    full = np.where(same, full, NEG_MASK).astype(np.float32)
    return jnp.asarray(np.transpose(full, (2, 0, 1)))


def init_params(kg):
    def dense(shape, std=0.02):
        return (jax.random.normal(kg(), shape) * std).astype(jnp.float32)

    def bf16(x):
        return x.astype(jnp.bfloat16)

    def bn(c):   # fold eval-mode BatchNorm into (scale, shift)
        gamma = jax.random.uniform(kg(), (c,), minval=0.8, maxval=1.2)
        beta = jax.random.normal(kg(), (c,)) * 0.01
        mean = jax.random.normal(kg(), (c,)) * 0.01
        var = jax.random.uniform(kg(), (c,), minval=0.8, maxval=1.2)
        scale = (gamma / jnp.sqrt(var + BN_EPS)).astype(jnp.float32)
        shift = (beta - mean * scale).astype(jnp.float32)
        return scale, shift

    p = {}
    # --- PillarVFE (lidar + radar) packed into one lane-dense PFN weight ---
    vfe = {}
    for name in ('lidar', 'radar'):
        s, b = bn(PFN_OUT)
        vfe[name] = {'w': dense((10, PFN_OUT), 0.1), 'scale': s, 'shift': b}
    wpk = jnp.zeros((20, 2 * PFN_OUT), jnp.float32)
    wpk = wpk.at[:10, :PFN_OUT].set(vfe['lidar']['w'])
    wpk = wpk.at[10:, PFN_OUT:].set(vfe['radar']['w'])
    p['vfe_packed'] = {
        'w': bf16(wpk),
        'scale': jnp.concatenate([vfe['lidar']['scale'], vfe['radar']['scale']]),
        'shift': jnp.concatenate([vfe['lidar']['shift'], vfe['radar']['shift']]),
    }

    # --- BaseBEVBackbone ---
    blocks = []
    c_in = [2 * PFN_OUT] + BB_FILTERS[:-1]
    for lvl in range(3):
        cin, cf = c_in[lvl], BB_FILTERS[lvl]
        s, b = bn(cf)
        convs = [{'w': bf16(dense((9 * cin, cf), 0.05)),      # stride-2 (im2col)
                  'scale': s, 'shift': b}]
        for _ in range(BB_LAYER_NUMS[lvl]):
            s, b = bn(cf)
            convs.append({'w': bf16(dense((9, cf, cf), 0.05)),  # direct conv
                          'scale': s, 'shift': b})
        us = BB_UP_STRIDES[lvl]
        s, b = bn(BB_UP_FILTER)
        deconv_p = {'w': bf16(dense((cf, BB_UP_FILTER * us * us), 0.05)),
                    'scale': jnp.repeat(s, us * us),
                    'shift': jnp.repeat(b, us * us),
                    'stride': us}
        blocks.append({'convs': convs, 'deconv': deconv_p})
    p['backbone'] = blocks

    # --- DownsampleConv (shrink header) ---
    p['shrink'] = {
        'c1': {'w': bf16(dense((9, 3 * BB_UP_FILTER, SHRINK_DIM), 0.05)),
               'bias': dense((SHRINK_DIM,), 0.01)},
        'c2': {'w': bf16(dense((9, SHRINK_DIM, SHRINK_DIM), 0.05)),
               'bias': dense((SHRINK_DIM,), 0.01)},
    }

    # --- SwapFusionEncoder ---
    D = SHRINK_DIM
    heads = D // DIM_HEAD
    dh = DIM_HEAD
    rel_idx = relative_position_index(MAX_CAV, WINDOW_SIZE)
    tbl_size = (2 * MAX_CAV - 1) * (2 * WINDOW_SIZE - 1) ** 2

    def attn_stage(mode):
        tbl = dense((tbl_size, heads), 0.02)
        bias_static = build_stage_bias(np.asarray(tbl), rel_idx, mode,
                                       MAX_CAV, FUSE_HW, FUSE_HW, WINDOW_SIZE)
        wqkv = dense((D, 3 * D), 0.02)
        wq = wqkv[:, :D] * (dh ** -0.5)                  # fold softmax scale
        wq3 = jnp.transpose(wq.reshape(D, heads, dh), (1, 0, 2))  # (h, D, dh)
        wkvT = jnp.transpose(wqkv[:, D:])                # (2D, D)
        return {'bias_static': bias_static,
                'ln_g': jnp.ones((1, D), jnp.float32) + dense((1, D), 0.01),
                'ln_b': dense((1, D), 0.01),
                'wq3': bf16(wq3), 'wkvT': bf16(wkvT),
                'wout': bf16(dense((D, D), 0.02))}

    def ffn_stage():
        return {'ln_g': jnp.ones((1, D), jnp.float32) + dense((1, D), 0.01),
                'ln_b': dense((1, D), 0.01),
                'w1': bf16(dense((D, MLP_DIM), 0.02)),
                'b1': dense((1, MLP_DIM), 0.01),
                'w2': bf16(dense((MLP_DIM, D), 0.02)),
                'b2': dense((1, D), 0.01)}

    fusion = []
    for _ in range(DEPTH):
        wa, wf = attn_stage('win'), ffn_stage()
        ga, gf = attn_stage('grid'), ffn_stage()
        fusion.append({
            'bias_static': jnp.stack([wa['bias_static'], ga['bias_static']], 0),
            'a_ln_g': jnp.stack([wa['ln_g'], ga['ln_g']], 0),
            'a_ln_b': jnp.stack([wa['ln_b'], ga['ln_b']], 0),
            'wq3': jnp.stack([wa['wq3'], ga['wq3']], 0),
            'wkvT': jnp.stack([wa['wkvT'], ga['wkvT']], 0),
            'wout': jnp.stack([wa['wout'], ga['wout']], 0),
            'f_ln_g': jnp.stack([wf['ln_g'], gf['ln_g']], 0),
            'f_ln_b': jnp.stack([wf['ln_b'], gf['ln_b']], 0),
            'w1': jnp.stack([wf['w1'], gf['w1']], 0),
            'b1': jnp.stack([wf['b1'], gf['b1']], 0),
            'w2': jnp.stack([wf['w2'], gf['w2']], 0),
            'b2': jnp.stack([wf['b2'], gf['b2']], 0),
        })
    p['fusion'] = fusion

    # fused mlp_head (LN + Linear) + cls/reg heads packed lane-dense (pad->128)
    cls_w = dense((D, ANCHOR_NUM), 0.02)
    cls_b = dense((ANCHOR_NUM,), 0.01)
    reg_w = dense((D, 7 * ANCHOR_NUM), 0.02)
    reg_b = dense((7 * ANCHOR_NUM,), 0.01)
    whr = jnp.zeros((D, HEAD_PAD), jnp.float32)
    whr = whr.at[:, :ANCHOR_NUM].set(cls_w)
    whr = whr.at[:, ANCHOR_NUM:ANCHOR_NUM + 7 * ANCHOR_NUM].set(reg_w)
    bhr = jnp.zeros((HEAD_PAD,), jnp.float32)
    bhr = bhr.at[:ANCHOR_NUM].set(cls_b)
    bhr = bhr.at[ANCHOR_NUM:ANCHOR_NUM + 7 * ANCHOR_NUM].set(reg_b)
    p['head'] = {'ln_g': jnp.ones((D,), jnp.float32) + dense((D,), 0.01),
                 'ln_b': dense((D,), 0.01),
                 'wm': bf16(dense((D, D), 0.02)), 'bm': dense((D,), 0.01),
                 'whr': bf16(whr), 'bhr': bhr}
    return p


def gen_voxel_data(kg, n_per_cav):
    coords_list = []
    for c in range(N_CAV):
        for v in range(n_per_cav):
            flat = (c * 37 + v * 5) % (GRID_NY * GRID_NX)
            coords_list.append([c, 0, flat // GRID_NX, flat % GRID_NX])
    coords = jnp.array(coords_list, dtype=jnp.int32)
    nv = coords.shape[0]
    npts = 1 + jax.random.randint(kg(), (nv,), 0, MAX_PTS)
    xs = jax.random.uniform(kg(), (nv, MAX_PTS, 1), minval=PC_RANGE[0], maxval=PC_RANGE[3])
    ys = jax.random.uniform(kg(), (nv, MAX_PTS, 1), minval=PC_RANGE[1], maxval=PC_RANGE[4])
    zs = jax.random.uniform(kg(), (nv, MAX_PTS, 1), minval=PC_RANGE[2], maxval=PC_RANGE[5])
    it = jax.random.uniform(kg(), (nv, MAX_PTS, 1))
    vf = jnp.concatenate([xs, ys, zs, it], axis=-1).astype(jnp.float32)
    mask = (jnp.arange(MAX_PTS)[None, :] < npts[:, None]).astype(jnp.float32)
    vf = vf * mask[..., None]
    return vf, coords, npts


if __name__ == "__main__":
    kg = KeyGen(jax.random.PRNGKey(0))
    params = init_params(kg)
    lidar = gen_voxel_data(kg, 12)   # (36, 8, 4), (36, 4), (36,)
    radar = gen_voxel_data(kg, 6)    # (18, 8, 4), (18, 4), (18,)

    out = forward(params, lidar, radar)
    jax.block_until_ready(out['psm'])
    jax.block_until_ready(out['rm'])
    assert out['psm'].shape == (BATCH, ANCHOR_NUM, 8, 8)
    assert out['rm'].shape == (BATCH, 7 * ANCHOR_NUM, 8, 8)
    assert bool(jnp.all(jnp.isfinite(out['psm']))) and bool(jnp.all(jnp.isfinite(out['rm'])))
    print("KERNEL_OK")
</pallas_src>

<mosaic_0001>
module attributes {stable_mosaic.version = 11 : i64} {
  func.func @_pfn_kernel(%arg0: i32, %arg1: memref<24x8x20xf32, #tpu.memory_space<vmem>>, %arg2: memref<20x128xbf16, #tpu.memory_space<vmem>>, %arg3: memref<1x128xf32, #tpu.memory_space<vmem>>, %arg4: memref<1x128xf32, #tpu.memory_space<vmem>>, %arg5: memref<24x128xbf16, #tpu.memory_space<vmem>>) attributes {dimension_semantics = [#tpu.dimension_semantics<parallel>], iteration_bounds = array<i64: 2>, scalar_prefetch = 0 : i64, scratch_operands = 0 : i64, tpu.core_type = #tpu.core_type<tc>, window_params = [{transform_indices = @transform_0, window_bounds = array<i64: 24, 8, 20>}, {pipeline_mode = #tpu.pipeline_mode<synchronous>, transform_indices = @transform_1, window_bounds = array<i64: 20, 128>}, {pipeline_mode = #tpu.pipeline_mode<synchronous>, transform_indices = @transform_2, window_bounds = array<i64: 1, 128>}, {pipeline_mode = #tpu.pipeline_mode<synchronous>, transform_indices = @transform_3, window_bounds = array<i64: 1, 128>}, {transform_indices = @transform_4, window_bounds = array<i64: 24, 128>}]} {
    %c0 = arith.constant 0 : index
    %c0_0 = arith.constant 0 : index
    %c0_1 = arith.constant 0 : index
    %0 = vector.load %arg1[%c0, %c0_0, %c0_1] : memref<24x8x20xf32, #tpu.memory_space<vmem>>, vector<24x8x20xf32>
    %1 = vector.shape_cast %0 : vector<24x8x20xf32> to vector<192x20xf32>
    %2 = arith.truncf %1 : vector<192x20xf32> to vector<192x20xbf16>
    %c0_2 = arith.constant 0 : index
    %c0_3 = arith.constant 0 : index
    %3 = vector.load %arg2[%c0_2, %c0_3] : memref<20x128xbf16, #tpu.memory_space<vmem>>, vector<20x128xbf16>
    %cst = arith.constant dense<0.000000e+00> : vector<192x128xf32>
    %4 = tpu.matmul %2, %3, %cst {dimension_numbers = #tpu.dot_dimension_numbers<[1], [0], [0], [1], [0, 0, 1, 1], [], []>} : vector<192x20xbf16>, vector<20x128xbf16>, vector<192x128xf32> -> vector<192x128xf32>
    %c0_4 = arith.constant 0 : index
    %c0_5 = arith.constant 0 : index
    %5 = vector.load %arg3[%c0_4, %c0_5] : memref<1x128xf32, #tpu.memory_space<vmem>>, vector<1x128xf32>
    %6 = vector.broadcast %5 : vector<1x128xf32> to vector<192x128xf32>
    %7 = arith.mulf %4, %6 : vector<192x128xf32>
    %c0_6 = arith.constant 0 : index
    %c0_7 = arith.constant 0 : index
    %8 = vector.load %arg4[%c0_6, %c0_7] : memref<1x128xf32, #tpu.memory_space<vmem>>, vector<1x128xf32>
    %9 = vector.broadcast %8 : vector<1x128xf32> to vector<192x128xf32>
    %10 = arith.addf %7, %9 : vector<192x128xf32>
    %cst_8 = arith.constant 0.000000e+00 : f32
    %11 = vector.broadcast %cst_8 : f32 to vector<192x128xf32>
    %12 = arith.maximumf %10, %11 : vector<192x128xf32>
    %13 = vector.shape_cast %12 : vector<192x128xf32> to vector<24x8x128xf32>
    %cst_9 = arith.constant dense<0xFF800000> : vector<24x128xf32>
    %14 = vector.multi_reduction <maximumf>, %13, %cst_9 [1] : vector<24x8x128xf32> to vector<24x128xf32>
    %15 = arith.truncf %14 : vector<24x128xf32> to vector<24x128xbf16>
    %c0_10 = arith.constant 0 : index
    %c0_11 = arith.constant 0 : index
    %16 = vector.load %arg5[%c0_10, %c0_11] : memref<24x128xbf16, #tpu.memory_space<vmem>>, vector<24x128xbf16>
    tpu.vector_store %arg5[%c0_10, %c0_11], %15 {strides = array<i32>} : memref<24x128xbf16, #tpu.memory_space<vmem>>, vector<24x128xbf16>,
    return
  }
  func.func @transform_0(%arg0: i32) -> (i32, i32, i32) {
    %c0_i32 = arith.constant 0 : i32
    %c0_i32_0 = arith.constant 0 : i32
    %c0_i32_1 = arith.constant 0 : i32
    return %arg0, %c0_i32, %c0_i32_0 : i32, i32, i32
  }
  func.func @transform_1(%arg0: i32) -> (i32, i32) {
    %c0_i32 = arith.constant 0 : i32
    %c0_i32_0 = arith.constant 0 : i32
    %c0_i32_1 = arith.constant 0 : i32
    return %c0_i32, %c0_i32_0 : i32, i32
  }
  func.func @transform_2(%arg0: i32) -> (i32, i32) {
    %c0_i32 = arith.constant 0 : i32
    %c0_i32_0 = arith.constant 0 : i32
    %c0_i32_1 = arith.constant 0 : i32
    return %c0_i32, %c0_i32_0 : i32, i32
  }
  func.func @transform_3(%arg0: i32) -> (i32, i32) {
    %c0_i32 = arith.constant 0 : i32
    %c0_i32_0 = arith.constant 0 : i32
    %c0_i32_1 = arith.constant 0 : i32
    return %c0_i32, %c0_i32_0 : i32, i32
  }
  func.func @transform_4(%arg0: i32) -> (i32, i32) {
    %c0_i32 = arith.constant 0 : i32
    %c0_i32_0 = arith.constant 0 : i32
    return %arg0, %c0_i32 : i32, i32
  }
}

</mosaic_0001>

<llo_original>
// kernel: tpu_custom_call.1
$region0: #{tpu_custom_call.1}
  #allocation0 [shape = 'u32[]', space=smem, size = 0x4, offset = 0x4, fixed_abs, tag = 'smem constant byte address 0x4 - core index']
  #allocation1 [shape = 'u32[144,128]{1,0:T(1,128)}', space=vmem, size = 0x12000, scoped, tag = 'internal scratch']
  %s0 = inlined_call_operand.vmem [shape: f32[48,8,20], index: 0, kind: input, shape index: {}]
  %s1 = inlined_call_operand.vmem [shape: bf16[20,128], index: 1, kind: input, shape index: {}]
  %s2 = inlined_call_operand.vmem [shape: f32[1,128], index: 2, kind: input, shape index: {}]
  %s3 = inlined_call_operand.vmem [shape: f32[1,128], index: 3, kind: input, shape index: {}]
  %s4 = inlined_call_operand.hbm [shape: bf16[48,128], index: 4, kind: output, shape index: {}]
  %s5 = sld [smem:[#allocation0]]
  $region49: #{tpu_custom_call.1} parent=0
    _
  %s7 = ssub.s32 1, %s5
  %s8 = scalar_select 0, %s7, %s5
  $region1: #{tpu_custom_call.1} parent=0
    #allocation2 [shape = 'u8[12288]{0}', space=vmem, size = 0x3000, scoped, tag = 'output window, operand 0']
    #allocation3 [shape = 's32[2]{0}', space=sflag, size = 0x8, scoped, tag = 'scoped memory for tpu_custom_call.1']
    %9 = vsyncpa [#allocation3], 0
    %s10 = scalar_lea.sflag [#allocation3], 1
    %11 = vsyncpa %s10, 0
    loop: start=0, step=1, limit=4
    $region2: #{tpu_custom_call.1} parent=1 // loop_pre_header
      _
    $region3: #{tpu_custom_call.1} parent=1 // loop_header
      %s13 = sphi 0, %s17
      %p14 = scmp.ge.s32.totalorder %s13, 4
      %s23 = sphi 0, %s25
      %s26 = sphi 0, %s23
      %s27 = sphi 0, %s26
      %s43 = sphi 0, %s27
      %s47 = sphi 0, %s47
      %s49 = sphi 0, %s47
      %s50 = sphi 0, %s49
      %s64 = sphi 0, %s50
      %s68 = sphi 0, %s68
      %s70 = sphi 0, %s68
      %s71 = sphi 0, %s70
      %s85 = sphi 0, %s71
      %s89 = sphi 0, %s89
      %s91 = sphi 0, %s89
      %s92 = sphi 0, %s91
      %s106 = sphi 0, %s92
      %s112 = sphi 0, %s114
      %s115 = sphi 0, %s112
      %s116 = sphi 0, %s115
      %s132 = sphi 0, %s116
    $region4: #{tpu_custom_call.1} parent=1 // loop_header_branch
      %16 = sbr.rel (%p14) target = $region8
    $region5: #{tpu_custom_call.1} parent=1 // loop_body
      %s18 = ssub.s32 %s13, 1
      %s19 = ssub.s32 %s13, 2
      %s20 = sadd.s32 %s13, 1
      %s21 = ssub.s32 %s13, %s20
      %p22 = scmp.eq.s32.totalorder %s21, 0
      %s24 = sadd.s32 %s23, 1
      %s25 = scalar_select %p22, %s23, %s24
      %p28 = pneg %p22
      %p29 = scmp.eq.s32.totalorder %s13, 1
      %p30 = por %p28, %p29
      %p31 = scmp.ne.s32.totalorder %s23, %s26
      %p32 = scmp.eq.s32.totalorder %s13, 0
      %p33 = por %p31, %p32
      %p34 = scmp.ne.s32.totalorder %s23, %s26
      %p35 = scmp.eq.s32.totalorder %s18, 1
      %p36 = por %p34, %p35
      %p37 = scmp.ne.s32.totalorder %s26, %s27
      %p38 = scmp.eq.s32.totalorder %s18, 0
      %p39 = por %p37, %p38
      %p40 = scmp.ne.s32.totalorder %s26, %s27
      %p41 = scmp.eq.s32.totalorder %s19, 1
      %p42 = por %p40, %p41
      %p44 = scmp.ne.s32.totalorder %s27, %s43
      %p45 = scmp.eq.s32.totalorder %s19, 0
      %p46 = por %p44, %p45
      %s48 = sadd.s32 %s47, 1
      %p51 = scmp.eq.s32.totalorder %s13, 1
      %p52 = scmp.ne.s32.totalorder %s47, %s49
      %p53 = scmp.eq.s32.totalorder %s13, 0
      %p54 = por %p52, %p53
      %p55 = scmp.ne.s32.totalorder %s47, %s49
      %p56 = scmp.eq.s32.totalorder %s18, 1
      %p57 = por %p55, %p56
      %p58 = scmp.ne.s32.totalorder %s49, %s50
      %p59 = scmp.eq.s32.totalorder %s18, 0
      %p60 = por %p58, %p59
      %p61 = scmp.ne.s32.totalorder %s49, %s50
      %p62 = scmp.eq.s32.totalorder %s19, 1
      %p63 = por %p61, %p62
      %p65 = scmp.ne.s32.totalorder %s50, %s64
      %p66 = scmp.eq.s32.totalorder %s19, 0
      %p67 = por %p65, %p66
      %s69 = sadd.s32 %s68, 1
      %p72 = scmp.eq.s32.totalorder %s13, 1
      %p73 = scmp.ne.s32.totalorder %s68, %s70
      %p74 = scmp.eq.s32.totalorder %s13, 0
      %p75 = por %p73, %p74
      %p76 = scmp.ne.s32.totalorder %s68, %s70
      %p77 = scmp.eq.s32.totalorder %s18, 1
      %p78 = por %p76, %p77
      %p79 = scmp.ne.s32.totalorder %s70, %s71
      %p80 = scmp.eq.s32.totalorder %s18, 0
      %p81 = por %p79, %p80
      %p82 = scmp.ne.s32.totalorder %s70, %s71
      %p83 = scmp.eq.s32.totalorder %s19, 1
      %p84 = por %p82, %p83
      %p86 = scmp.ne.s32.totalorder %s71, %s85
      %p87 = scmp.eq.s32.totalorder %s19, 0
      %p88 = por %p86, %p87
      %s90 = sadd.s32 %s89, 1
      %p93 = scmp.eq.s32.totalorder %s13, 1
      %p94 = scmp.ne.s32.totalorder %s89, %s91
      %p95 = scmp.eq.s32.totalorder %s13, 0
      %p96 = por %p94, %p95
      %p97 = scmp.ne.s32.totalorder %s89, %s91
      %p98 = scmp.eq.s32.totalorder %s18, 1
      %p99 = por %p97, %p98
      %p100 = scmp.ne.s32.totalorder %s91, %s92
      %p101 = scmp.eq.s32.totalorder %s18, 0
      %p102 = por %p100, %p101
      %p103 = scmp.ne.s32.totalorder %s91, %s92
      %p104 = scmp.eq.s32.totalorder %s19, 1
      %p105 = por %p103, %p104
      %p107 = scmp.ne.s32.totalorder %s92, %s106
      %p108 = scmp.eq.s32.totalorder %s19, 0
      %p109 = por %p107, %p108
      %s110 = ssub.s32 %s13, %s20
      %p111 = scmp.eq.s32.totalorder %s110, 0
      %s113 = sadd.s32 %s112, 1
      %s114 = scalar_select %p111, %s112, %s113
      %p117 = pneg %p111
      %p118 = scmp.eq.s32.totalorder %s13, 1
      %p119 = por %p117, %p118
      %p120 = scmp.ne.s32.totalorder %s112, %s115
      %p121 = scmp.eq.s32.totalorder %s13, 0
      %p122 = por %p120, %p121
      %p123 = scmp.ne.s32.totalorder %s112, %s115
      %p124 = scmp.eq.s32.totalorder %s18, 1
      %p125 = por %p123, %p124
      %p126 = scmp.ne.s32.totalorder %s115, %s116
      %p127 = scmp.eq.s32.totalorder %s18, 0
      %p128 = por %p126, %p127
      %p129 = scmp.ne.s32.totalorder %s115, %s116
      %p130 = scmp.eq.s32.totalorder %s19, 1
      %p131 = por %p129, %p130
      %p133 = scmp.ne.s32.totalorder %s116, %s132
      %p134 = scmp.eq.s32.totalorder %s19, 0
      %p135 = por %p133, %p134
      %p136 = scmp.le.s32.totalorder 1, %s13
      %p137 = scmp.lt.s32.totalorder %s13, 3
      %p138 = pnand %p136, %p137
      %p139 = pneg %p138
      // Predicated region
      $region9: #{tpu_custom_call.1} parent=5 // pred_check
        _
      $region10: #{tpu_custom_call.1} parent=5 // pred_check_branch
        %141 = sbr.rel (%p138) target = $region12
      $region11: #{tpu_custom_call.1} parent=5 // pred_region
        %s142 = ssub.s32 %s13, 1
        // Predicated region
        $region13: #{tpu_custom_call.1} parent=11 // pred_check
          %p143 = pneg %p60
        $region14: #{tpu_custom_call.1} parent=11 // pred_check_branch
          %145 = sbr.rel (%p143) target = $region16
        $region15: #{tpu_custom_call.1} parent=11 // pred_region
          _
        $region16: #{tpu_custom_call.1} parent=11 // pred_fallthru
          _
        // Predicated region
        $region17: #{tpu_custom_call.1} parent=11 // pred_check
          %p146 = pneg %p81
        $region18: #{tpu_custom_call.1} parent=11 // pred_check_branch
          %148 = sbr.rel (%p146) target = $region20
        $region19: #{tpu_custom_call.1} parent=11 // pred_region
          _
        $region20: #{tpu_custom_call.1} parent=11 // pred_fallthru
          _
        // Predicated region
        $region21: #{tpu_custom_call.1} parent=11 // pred_check
          %p149 = pneg %p102
        $region22: #{tpu_custom_call.1} parent=11 // pred_check_branch
          %151 = sbr.rel (%p149) target = $region24
        $region23: #{tpu_custom_call.1} parent=11 // pred_region
          _
        $region24: #{tpu_custom_call.1} parent=11 // pred_fallthru
          _
      $region12: #{tpu_custom_call.1} parent=5 // pred_fallthru
        _
      %p152 = scmp.lt.s32.totalorder %s13, 2
      // Predicated region
      $region25: #{tpu_custom_call.1} parent=5 // pred_check
        %p153 = pneg %p152
      $region26: #{tpu_custom_call.1} parent=5 // pred_check_branch
        %155 = sbr.rel (%p153) target = $region28
      $region27: #{tpu_custom_call.1} parent=5 // pred_region
        // Predicated region
        $region29: #{tpu_custom_call.1} parent=27 // pred_check
          %p156 = pneg %p33
        $region30: #{tpu_custom_call.1} parent=27 // pred_check_branch
          %158 = sbr.rel (%p156) target = $region32
        $region31: #{tpu_custom_call.1} parent=27 // pred_region
          %s159 = smul.u32 24, %s13
          %p160 = scmp.lt.s32.totalorder %s159, 47
          %s161 = scalar_select %p160, %s159, 47
          %s162 = smul.addr %s161, 8
          %s163 = scalar_lea.vmem %s0, %s162
          %s164 = smul.u32 24, %s13
        $region32: #{tpu_custom_call.1} parent=27 // pred_fallthru
          _
      $region28: #{tpu_custom_call.1} parent=5 // pred_fallthru
        _
      %p165 = scmp.le.s32.totalorder 1, %s13
      %p166 = scmp.lt.s32.totalorder %s13, 3
      %p167 = pnand %p165, %p166
      %p168 = pneg %p167
      // Predicated region
      $region33: #{tpu_custom_call.1} parent=5 // pred_check
        _
      $region34: #{tpu_custom_call.1} parent=5 // pred_check_branch
        %170 = sbr.rel (%p167) target = $region36
      $region35: #{tpu_custom_call.1} parent=5 // pred_region
        %s171 = ssub.s32 %s13, 1
        %s172 = smul.u32 24, %s18
        %p173 = scmp.lt.s32.totalorder %s172, 47
        %s174 = scalar_select %p173, %s172, 47
        %s175 = smul.addr %s174, 8
        %s176 = scalar_lea.vmem %s0, %s175
        %p177 = pneg %p39
        %p178 = pneg %p36
        %p179 = pneg %p60
        %p180 = pneg %p57
        %p181 = pneg %p81
        %p182 = pneg %p78
        %p183 = pneg %p102
        %p184 = pneg %p99
        %p185 = pneg %p128
        %p186 = pneg %p125
        %s187 = sand.u32 %s115, 1
        %s188 = scalar_lea.sflag [#allocation3], %s187
        %s189 = sand.u32 %s115, 1
        %s190 = smul.addr %s189, 12
        %s191 = scalar_lea.vmem [#allocation2], %s190
        %s192 = smul.u32 24, %s18
        %p193 = scmp.lt.s32.totalorder %s192, 47
        %s194 = scalar_select %p193, %s192, 47
        %s195 = smul.addr %s194, 8
        %s196 = scalar_lea.vmem %s0, %s195
        %s197 = smul.u32 24, %s18
        %s198 = smul.u32 3, %s18
        %v200 = vld [vmem:[%s196] sm:$0xff]
        %v201 = vld [vmem:[%s196 + $0x8] sm:$0xff]
        %v202 = vld [vmem:[%s196 + $0x10] sm:$0xff]
        %v203 = vld [vmem:[%s196 + $0x18] sm:$0xff]
        %v204 = vld [vmem:[%s196 + $0x20] sm:$0xff]
        %v205 = vld [vmem:[%s196 + $0x28] sm:$0xff]
        %v206 = vld [vmem:[%s196 + $0x30] sm:$0xff]
        %v207 = vld [vmem:[%s196 + $0x38] sm:$0xff]
        %v208 = vld [vmem:[%s196 + $0x40] sm:$0xff]
        %v209 = vld [vmem:[%s196 + $0x48] sm:$0xff]
        %v210 = vld [vmem:[%s196 + $0x50] sm:$0xff]
        %v211 = vld [vmem:[%s196 + $0x58] sm:$0xff]
        %v212 = vld [vmem:[%s196 + $0x60] sm:$0xff]
        %v213 = vld [vmem:[%s196 + $0x68] sm:$0xff]
        %v214 = vld [vmem:[%s196 + $0x70] sm:$0xff]
        %v215 = vld [vmem:[%s196 + $0x78] sm:$0xff]
        %v216 = vld [vmem:[%s196 + $0x80] sm:$0xff]
        %v217 = vld [vmem:[%s196 + $0x88] sm:$0xff]
        %v218 = vld [vmem:[%s196 + $0x90] sm:$0xff]
        %v219 = vld [vmem:[%s196 + $0x98] sm:$0xff]
        %v220 = vld [vmem:[%s196 + $0xa0] sm:$0xff]
        %v221 = vld [vmem:[%s196 + $0xa8] sm:$0xff]
        %v222 = vld [vmem:[%s196 + $0xb0] sm:$0xff]
        %v223 = vld [vmem:[%s196 + $0xb8] sm:$0xff]
        %v224 = vpack.c.bf16 %v201, %v200
        %v225 = vpack.c.bf16 %v203, %v202
        %v226 = vpack.c.bf16 %v205, %v204
        %v227 = vpack.c.bf16 %v207, %v206
        %v228 = vpack.c.bf16 %v209, %v208
        %v229 = vpack.c.bf16 %v211, %v210
        %v230 = vpack.c.bf16 %v213, %v212
        %v231 = vpack.c.bf16 %v215, %v214
        %v232 = vpack.c.bf16 %v217, %v216
        %v233 = vpack.c.bf16 %v219, %v218
        %v234 = vpack.c.bf16 %v221, %v220
        %v235 = vpack.c.bf16 %v223, %v222
        %v236 = vld [vmem:[%s1] sm:$0xf]
        %v237 = vld [vmem:[%s1 + $0x4] sm:$0xf]
        %v238 = vld [vmem:[%s1 + $0x8] sm:$0x3]
        %v242 = vunpack.c.l.b16 %v236
        %v243 = vunpack.c.l.b16 %v237
        %v244 = vunpack.c.l.b16 %v238
        %v245 = vpack.c.b16 %v243, %v242
        %v246 = vpack.c.b16 %v244, %v244
        %vm248 = vcmask 162816
        %v250 = vsel %vm248, %v224, 0
        %v253 = vsel %vm248, %v225, 0
        %v256 = vsel %vm248, %v226, 0
        %v259 = vsel %vm248, %v227, 0
        %v262 = vsel %vm248, %v228, 0
        %v265 = vsel %vm248, %v229, 0
        %v268 = vsel %vm248, %v230, 0
        %v271 = vsel %vm248, %v231, 0
        %v274 = vsel %vm248, %v232, 0
        %v277 = vsel %vm248, %v233, 0
        %v280 = vsel %vm248, %v234, 0
        %v283 = vsel %vm248, %v235, 0
        %vm285 = vcmask 1041408
        %v287 = vsel %vm285, %v246, 0
        %289 = vmatprep.subr.bf16.mxu0 0
        %290 = vmatpush1.bf16.msra.mxu0 0
        %291 = vmatprep.subr.bf16.mxu0 0
        %292 = vmatpush1.bf16.msra.mxu0 0
        %293 = vmatprep.subr.bf16.mxu0 0
        %294 = vmatpush1.bf16.msra.mxu0 0
        %295 = vmatprep.subr.bf16.mxu0 0
        %296 = vmatpush1.bf16.msra.mxu0 0
        %297 = vmatprep.subr.bf16.mxu0 0
        %298 = vmatpush1.bf16.msra.mxu0 0
        %299 = vmatprep.subr.bf16.mxu0 0
        %300 = vmatpush1.bf16.msra.mxu0 0
        %301 = vmatprep.subr.bf16.mxu0 0
        %302 = vmatpush1.bf16.msra.mxu0 %v287
        %303 = vmatprep.subr.bf16.mxu0 0
        %304 = vmatpush1.bf16.msra.mxu0 %v245
        %305 = vmatprep.subr.bf16.mxu0 0
        %306 = vmatpush2.bf16.msra.mxu0 0
        %307 = vmatprep.subr.bf16.mxu0 0
        %308 = vmatpush2.bf16.msra.mxu0 0
        %309 = vmatprep.subr.bf16.mxu0 0
        %310 = vmatpush2.bf16.msra.mxu0 0
        %311 = vmatprep.subr.bf16.mxu0 0
        %312 = vmatpush2.bf16.msra.mxu0 0
        %313 = vmatprep.subr.bf16.mxu0 0
        %314 = vmatpush2.bf16.msra.mxu0 0
        %315 = vmatprep.subr.bf16.mxu0 0
        %316 = vmatpush2.bf16.msra.mxu0 0
        %317 = vmatprep.subr.bf16.mxu0 0
        %318 = vmatpush2.bf16.msra.mxu0 0
        %319 = vmatprep.subr.bf16.mxu0 0
        %320 = vmatpush2.bf16.msra.mxu0 0
        %321 = vmatprep.mubr.bf16.mxu0 0
        %322 = vmatmul.mubr.bf16.gmra.mxu0 %v250
        %v323 = vpop.f32.mrf.mxu0
        %v324 = vadd.f32 0.0, %v323
        %v325 = vpop.f32.mrf.mxu0
        %v326 = vpop.f32.mrf.mxu0
        %v327 = vadd.f32 0.0, %v326
        %v328 = vpop.f32.mrf.mxu0
        %329 = vmatprep.mubr.bf16.mxu0 0
        %330 = vmatmul.mubr.bf16.gmra.mxu0 %v253
        %v331 = vpop.f32.mrf.mxu0
        %v332 = vadd.f32 0.0, %v331
        %v333 = vpop.f32.mrf.mxu0
        %v334 = vpop.f32.mrf.mxu0
        %v335 = vadd.f32 0.0, %v334
        %v336 = vpop.f32.mrf.mxu0
        %337 = vmatprep.mubr.bf16.mxu0 0
        %338 = vmatmul.mubr.bf16.gmra.mxu0 %v256
        %v339 = vpop.f32.mrf.mxu0
        %v340 = vadd.f32 0.0, %v339
        %v341 = vpop.f32.mrf.mxu0
        %v342 = vpop.f32.mrf.mxu0
        %v343 = vadd.f32 0.0, %v342
        %v344 = vpop.f32.mrf.mxu0
        %345 = vmatprep.mubr.bf16.mxu0 0
        %346 = vmatmul.mubr.bf16.gmra.mxu0 %v259
        %v347 = vpop.f32.mrf.mxu0
        %v348 = vadd.f32 0.0, %v347
        %v349 = vpop.f32.mrf.mxu0
        %v350 = vpop.f32.mrf.mxu0
        %v351 = vadd.f32 0.0, %v350
        %v352 = vpop.f32.mrf.mxu0
        %353 = vmatprep.mubr.bf16.mxu0 0
        %354 = vmatmul.mubr.bf16.gmra.mxu0 %v262
        %v355 = vpop.f32.mrf.mxu0
        %v356 = vadd.f32 0.0, %v355
        %v357 = vpop.f32.mrf.mxu0
        %v358 = vpop.f32.mrf.mxu0
        %v359 = vadd.f32 0.0, %v358
        %v360 = vpop.f32.mrf.mxu0
        %361 = vmatprep.mubr.bf16.mxu0 0
        %362 = vmatmul.mubr.bf16.gmra.mxu0 %v265
        %v363 = vpop.f32.mrf.mxu0
        %v364 = vadd.f32 0.0, %v363
        %v365 = vpop.f32.mrf.mxu0
        %v366 = vpop.f32.mrf.mxu0
        %v367 = vadd.f32 0.0, %v366
        %v368 = vpop.f32.mrf.mxu0
        %369 = vmatprep.mubr.bf16.mxu0 0
        %370 = vmatmul.mubr.bf16.gmra.mxu0 %v268
        %v371 = vpop.f32.mrf.mxu0
        %v372 = vadd.f32 0.0, %v371
        %v373 = vpop.f32.mrf.mxu0
        %v374 = vpop.f32.mrf.mxu0
        %v375 = vadd.f32 0.0, %v374
        %v376 = vpop.f32.mrf.mxu0
        %377 = vmatprep.mubr.bf16.mxu0 0
        %378 = vmatmul.mubr.bf16.gmra.mxu0 %v271
        %v379 = vpop.f32.mrf.mxu0
        %v380 = vadd.f32 0.0, %v379
        %v381 = vpop.f32.mrf.mxu0
        %v382 = vpop.f32.mrf.mxu0
        %v383 = vadd.f32 0.0, %v382
        %v384 = vpop.f32.mrf.mxu0
        %385 = vmatprep.mubr.bf16.mxu0 0
        %386 = vmatmul.mubr.bf16.gmra.mxu0 %v274
        %v387 = vpop.f32.mrf.mxu0
        %v388 = vadd.f32 0.0, %v387
        %v389 = vpop.f32.mrf.mxu0
        %v390 = vpop.f32.mrf.mxu0
        %v391 = vadd.f32 0.0, %v390
        %v392 = vpop.f32.mrf.mxu0
        %393 = vmatprep.mubr.bf16.mxu0 0
        %394 = vmatmul.mubr.bf16.gmra.mxu0 %v277
        %v395 = vpop.f32.mrf.mxu0
        %v396 = vadd.f32 0.0, %v395
        %v397 = vpop.f32.mrf.mxu0
        %v398 = vpop.f32.mrf.mxu0
        %v399 = vadd.f32 0.0, %v398
        %v400 = vpop.f32.mrf.mxu0
        %401 = vmatprep.mubr.bf16.mxu0 0
        %402 = vmatmul.mubr.bf16.gmra.mxu0 %v280
        %v403 = vpop.f32.mrf.mxu0
        %v404 = vadd.f32 0.0, %v403
        %v405 = vpop.f32.mrf.mxu0
        %v406 = vpop.f32.mrf.mxu0
        %v407 = vadd.f32 0.0, %v406
        %v408 = vpop.f32.mrf.mxu0
        %409 = vmatprep.mubr.bf16.mxu0 0
        %410 = vmatmul.mubr.bf16.gmra.mxu0 %v283
        %v411 = vpop.f32.mrf.mxu0
        %v412 = vadd.f32 0.0, %v411
        %v413 = vpop.f32.mrf.mxu0
        %v414 = vpop.f32.mrf.mxu0
        %v415 = vadd.f32 0.0, %v414
        %v416 = vpop.f32.mrf.mxu0
        %417 = vdwg.mxu0
        %v418 = vld [vmem:[%s2] sm:$0x1]
        %v420 = vlaneseq
        %v421 = vshrl.u32 %v420, 7
        %v422 = vsub.s32 0, %v421
        %v423 = vrot.slane %v418, %v422
        %v425 = vmul.f32 %v324, %v423
        %v426 = vmul.f32 %v327, %v423
        %v427 = vmul.f32 %v332, %v423
        %v428 = vmul.f32 %v335, %v423
        %v429 = vmul.f32 %v340, %v423
        %v430 = vmul.f32 %v343, %v423
        %v431 = vmul.f32 %v348, %v423
        %v432 = vmul.f32 %v351, %v423
        %v433 = vmul.f32 %v356, %v423
        %v434 = vmul.f32 %v359, %v423
        %v435 = vmul.f32 %v364, %v423
        %v436 = vmul.f32 %v367, %v423
        %v437 = vmul.f32 %v372, %v423
        %v438 = vmul.f32 %v375, %v423
        %v439 = vmul.f32 %v380, %v423
        %v440 = vmul.f32 %v383, %v423
        %v441 = vmul.f32 %v388, %v423
        %v442 = vmul.f32 %v391, %v423
        %v443 = vmul.f32 %v396, %v423
        %v444 = vmul.f32 %v399, %v423
        %v445 = vmul.f32 %v404, %v423
        %v446 = vmul.f32 %v407, %v423
        %v447 = vmul.f32 %v412, %v423
        %v448 = vmul.f32 %v415, %v423
        %v449 = vld [vmem:[%s3] sm:$0x1]
        %v451 = vlaneseq
        %v452 = vshrl.u32 %v451, 7
        %v453 = vsub.s32 0, %v452
        %v454 = vrot.slane %v449, %v453
        %v456 = vadd.f32 %v425, %v454
        %v457 = vadd.f32 %v426, %v454
        %v458 = vadd.f32 %v427, %v454
        %v459 = vadd.f32 %v428, %v454
        %v460 = vadd.f32 %v429, %v454
        %v461 = vadd.f32 %v430, %v454
        %v462 = vadd.f32 %v431, %v454
        %v463 = vadd.f32 %v432, %v454
        %v464 = vadd.f32 %v433, %v454
        %v465 = vadd.f32 %v434, %v454
        %v466 = vadd.f32 %v435, %v454
        %v467 = vadd.f32 %v436, %v454
        %v468 = vadd.f32 %v437, %v454
        %v469 = vadd.f32 %v438, %v454
        %v470 = vadd.f32 %v439, %v454
        %v471 = vadd.f32 %v440, %v454
        %v472 = vadd.f32 %v441, %v454
        %v473 = vadd.f32 %v442, %v454
        %v474 = vadd.f32 %v443, %v454
        %v475 = vadd.f32 %v444, %v454
        %v476 = vadd.f32 %v445, %v454
        %v477 = vadd.f32 %v446, %v454
        %v478 = vadd.f32 %v447, %v454
        %v479 = vadd.f32 %v448, %v454
        %v480 = vmax.f32 %v456, 0.0
        %v481 = vmax.f32 %v457, 0.0
        %v482 = vmax.f32 %v458, 0.0
        %v483 = vmax.f32 %v459, 0.0
        %v484 = vmax.f32 %v460, 0.0
        %v485 = vmax.f32 %v461, 0.0
        %v486 = vmax.f32 %v462, 0.0
        %v487 = vmax.f32 %v463, 0.0
        %v488 = vmax.f32 %v464, 0.0
        %v489 = vmax.f32 %v465, 0.0
        %v490 = vmax.f32 %v466, 0.0
        %v491 = vmax.f32 %v467, 0.0
        %v492 = vmax.f32 %v468, 0.0
        %v493 = vmax.f32 %v469, 0.0
        %v494 = vmax.f32 %v470, 0.0
        %v495 = vmax.f32 %v471, 0.0
        %v496 = vmax.f32 %v472, 0.0
        %v497 = vmax.f32 %v473, 0.0
        %v498 = vmax.f32 %v474, 0.0
        %v499 = vmax.f32 %v475, 0.0
        %v500 = vmax.f32 %v476, 0.0
        %v501 = vmax.f32 %v477, 0.0
        %v502 = vmax.f32 %v478, 0.0
        %v503 = vmax.f32 %v479, 0.0
        %v504 = vrot.slane %v480, 4
        %v505 = vmax.f32 %v480, %v504
        %v506 = vrot.slane %v505, 2
        %v507 = vmax.f32 %v505, %v506
        %v508 = vrot.slane %v507, 1
        %v509 = vmax.f32 %v507, %v508
        %v510 = vrot.slane %v481, 4
        %v511 = vmax.f32 %v481, %v510
        %v512 = vrot.slane %v511, 2
        %v513 = vmax.f32 %v511, %v512
        %v514 = vrot.slane %v513, 1
        %v515 = vmax.f32 %v513, %v514
        %v516 = vrot.slane %v482, 4
        %v517 = vmax.f32 %v482, %v516
        %v518 = vrot.slane %v517, 2
        %v519 = vmax.f32 %v517, %v518
        %v520 = vrot.slane %v519, 1
        %v521 = vmax.f32 %v519, %v520
        %v522 = vrot.slane %v483, 4
        %v523 = vmax.f32 %v483, %v522
        %v524 = vrot.slane %v523, 2
        %v525 = vmax.f32 %v523, %v524
        %v526 = vrot.slane %v525, 1
        %v527 = vmax.f32 %v525, %v526
        %v528 = vrot.slane %v484, 4
        %v529 = vmax.f32 %v484, %v528
        %v530 = vrot.slane %v529, 2
        %v531 = vmax.f32 %v529, %v530
        %v532 = vrot.slane %v531, 1
        %v533 = vmax.f32 %v531, %v532
        %v534 = vrot.slane %v485, 4
        %v535 = vmax.f32 %v485, %v534
        %v536 = vrot.slane %v535, 2
        %v537 = vmax.f32 %v535, %v536
        %v538 = vrot.slane %v537, 1
        %v539 = vmax.f32 %v537, %v538
        %v540 = vrot.slane %v486, 4
        %v541 = vmax.f32 %v486, %v540
        %v542 = vrot.slane %v541, 2
        %v543 = vmax.f32 %v541, %v542
        %v544 = vrot.slane %v543, 1
        %v545 = vmax.f32 %v543, %v544
        %v546 = vrot.slane %v487, 4
        %v547 = vmax.f32 %v487, %v546
        %v548 = vrot.slane %v547, 2
        %v549 = vmax.f32 %v547, %v548
        %v550 = vrot.slane %v549, 1
        %v551 = vmax.f32 %v549, %v550
        %v552 = vrot.slane %v488, 4
        %v553 = vmax.f32 %v488, %v552
        %v554 = vrot.slane %v553, 2
        %v555 = vmax.f32 %v553, %v554
        %v556 = vrot.slane %v555, 1
        %v557 = vmax.f32 %v555, %v556
        %v558 = vrot.slane %v489, 4
        %v559 = vmax.f32 %v489, %v558
        %v560 = vrot.slane %v559, 2
        %v561 = vmax.f32 %v559, %v560
        %v562 = vrot.slane %v561, 1
        %v563 = vmax.f32 %v561, %v562
        %v564 = vrot.slane %v490, 4
        %v565 = vmax.f32 %v490, %v564
        %v566 = vrot.slane %v565, 2
        %v567 = vmax.f32 %v565, %v566
        %v568 = vrot.slane %v567, 1
        %v569 = vmax.f32 %v567, %v568
        %v570 = vrot.slane %v491, 4
        %v571 = vmax.f32 %v491, %v570
        %v572 = vrot.slane %v571, 2
        %v573 = vmax.f32 %v571, %v572
        %v574 = vrot.slane %v573, 1
        %v575 = vmax.f32 %v573, %v574
        %v576 = vrot.slane %v492, 4
        %v577 = vmax.f32 %v492, %v576
        %v578 = vrot.slane %v577, 2
        %v579 = vmax.f32 %v577, %v578
        %v580 = vrot.slane %v579, 1
        %v581 = vmax.f32 %v579, %v580
        %v582 = vrot.slane %v493, 4
        %v583 = vmax.f32 %v493, %v582
        %v584 = vrot.slane %v583, 2
        %v585 = vmax.f32 %v583, %v584
        %v586 = vrot.slane %v585, 1
        %v587 = vmax.f32 %v585, %v586
        %v588 = vrot.slane %v494, 4
        %v589 = vmax.f32 %v494, %v588
        %v590 = vrot.slane %v589, 2
        %v591 = vmax.f32 %v589, %v590
        %v592 = vrot.slane %v591, 1
        %v593 = vmax.f32 %v591, %v592
        %v594 = vrot.slane %v495, 4
        %v595 = vmax.f32 %v495, %v594
        %v596 = vrot.slane %v595, 2
        %v597 = vmax.f32 %v595, %v596
        %v598 = vrot.slane %v597, 1
        %v599 = vmax.f32 %v597, %v598
        %v600 = vrot.slane %v496, 4
        %v601 = vmax.f32 %v496, %v600
        %v602 = vrot.slane %v601, 2
        %v603 = vmax.f32 %v601, %v602
        %v604 = vrot.slane %v603, 1
        %v605 = vmax.f32 %v603, %v604
        %v606 = vrot.slane %v497, 4
        %v607 = vmax.f32 %v497, %v606
        %v608 = vrot.slane %v607, 2
        %v609 = vmax.f32 %v607, %v608
        %v610 = vrot.slane %v609, 1
        %v611 = vmax.f32 %v609, %v610
        %v612 = vrot.slane %v498, 4
        %v613 = vmax.f32 %v498, %v612
        %v614 = vrot.slane %v613, 2
        %v615 = vmax.f32 %v613, %v614
        %v616 = vrot.slane %v615, 1
        %v617 = vmax.f32 %v615, %v616
        %v618 = vrot.slane %v499, 4
        %v619 = vmax.f32 %v499, %v618
        %v620 = vrot.slane %v619, 2
        %v621 = vmax.f32 %v619, %v620
        %v622 = vrot.slane %v621, 1
        %v623 = vmax.f32 %v621, %v622
        %v624 = vrot.slane %v500, 4
        %v625 = vmax.f32 %v500, %v624
        %v626 = vrot.slane %v625, 2
        %v627 = vmax.f32 %v625, %v626
        %v628 = vrot.slane %v627, 1
        %v629 = vmax.f32 %v627, %v628
        %v630 = vrot.slane %v501, 4
        %v631 = vmax.f32 %v501, %v630
        %v632 = vrot.slane %v631, 2
        %v633 = vmax.f32 %v631, %v632
        %v634 = vrot.slane %v633, 1
        %v635 = vmax.f32 %v633, %v634
        %v636 = vrot.slane %v502, 4
        %v637 = vmax.f32 %v502, %v636
        %v638 = vrot.slane %v637, 2
        %v639 = vmax.f32 %v637, %v638
        %v640 = vrot.slane %v639, 1
        %v641 = vmax.f32 %v639, %v640
        %v642 = vrot.slane %v503, 4
        %v643 = vmax.f32 %v503, %v642
        %v644 = vrot.slane %v643, 2
        %v645 = vmax.f32 %v643, %v644
        %v646 = vrot.slane %v645, 1
        %v647 = vmax.f32 %v645, %v646
        %v648 = vpack.c.bf16 %v509, %v509
        %v649 = vpack.c.bf16 %v515, %v515
        %v650 = vpack.c.bf16 %v521, %v521
        %v651 = vpack.c.bf16 %v527, %v527
        %v652 = vpack.c.bf16 %v533, %v533
        %v653 = vpack.c.bf16 %v539, %v539
        %v654 = vpack.c.bf16 %v545, %v545
        %v655 = vpack.c.bf16 %v551, %v551
        %v656 = vpack.c.bf16 %v557, %v557
        %v657 = vpack.c.bf16 %v563, %v563
        %v658 = vpack.c.bf16 %v569, %v569
        %v659 = vpack.c.bf16 %v575, %v575
        %v660 = vpack.c.bf16 %v581, %v581
        %v661 = vpack.c.bf16 %v587, %v587
        %v662 = vpack.c.bf16 %v593, %v593
        %v663 = vpack.c.bf16 %v599, %v599
        %v664 = vpack.c.bf16 %v605, %v605
        %v665 = vpack.c.bf16 %v611, %v611
        %v666 = vpack.c.bf16 %v617, %v617
        %v667 = vpack.c.bf16 %v623, %v623
        %v668 = vpack.c.bf16 %v629, %v629
        %v669 = vpack.c.bf16 %v635, %v635
        %v670 = vpack.c.bf16 %v641, %v641
        %v671 = vpack.c.bf16 %v647, %v647
        %v696 = vunpack.c.l.b16 %v648
        %v697 = vunpack.c.l.b16 %v649
        %v698 = vunpack.c.l.b16 %v650
        %v699 = vunpack.c.l.b16 %v651
        %v700 = vunpack.c.l.b16 %v652
        %v701 = vunpack.c.l.b16 %v653
        %v702 = vunpack.c.l.b16 %v654
        %v703 = vunpack.c.l.b16 %v655
        %v704 = vunpack.c.l.b16 %v656
        %v705 = vunpack.c.l.b16 %v657
        %v706 = vunpack.c.l.b16 %v658
        %v707 = vunpack.c.l.b16 %v659
        %v708 = vunpack.c.l.b16 %v660
        %v709 = vunpack.c.l.b16 %v661
        %v710 = vunpack.c.l.b16 %v662
        %v711 = vunpack.c.l.b16 %v663
        %v712 = vunpack.c.l.b16 %v664
        %v713 = vunpack.c.l.b16 %v665
        %v714 = vunpack.c.l.b16 %v666
        %v715 = vunpack.c.l.b16 %v667
        %v716 = vunpack.c.l.b16 %v668
        %v717 = vunpack.c.l.b16 %v669
        %v718 = vunpack.c.l.b16 %v670
        %v719 = vunpack.c.l.b16 %v671
        %v720 = vpack.c.b16 %v696, %v696
        %v721 = vpack.c.b16 %v697, %v697
        %v722 = vpack.c.b16 %v698, %v698
        %v723 = vpack.c.b16 %v699, %v699
        %v724 = vpack.c.b16 %v700, %v700
        %v725 = vpack.c.b16 %v701, %v701
        %v726 = vpack.c.b16 %v702, %v702
        %v727 = vpack.c.b16 %v703, %v703
        %v728 = vpack.c.b16 %v704, %v704
        %v729 = vpack.c.b16 %v705, %v705
        %v730 = vpack.c.b16 %v706, %v706
        %v731 = vpack.c.b16 %v707, %v707
        %v732 = vpack.c.b16 %v708, %v708
        %v733 = vpack.c.b16 %v709, %v709
        %v734 = vpack.c.b16 %v710, %v710
        %v735 = vpack.c.b16 %v711, %v711
        %v736 = vpack.c.b16 %v712, %v712
        %v737 = vpack.c.b16 %v713, %v713
        %v738 = vpack.c.b16 %v714, %v714
        %v739 = vpack.c.b16 %v715, %v715
        %v740 = vpack.c.b16 %v716, %v716
        %v741 = vpack.c.b16 %v717, %v717
        %v742 = vpack.c.b16 %v718, %v718
        %v743 = vpack.c.b16 %v719, %v719
        %v744 = vunpack.c.l.b16 %v720
        %v745 = vunpack.c.l.b16 %v721
        %v746 = vunpack.c.l.b16 %v722
        %v747 = vunpack.c.l.b16 %v723
        %v748 = vunpack.c.l.b16 %v724
        %v749 = vunpack.c.l.b16 %v725
        %v750 = vunpack.c.l.b16 %v726
        %v751 = vunpack.c.l.b16 %v727
        %v752 = vunpack.c.l.b16 %v728
        %v753 = vunpack.c.l.b16 %v729
        %v754 = vunpack.c.l.b16 %v730
        %v755 = vunpack.c.l.b16 %v731
        %v756 = vunpack.c.l.b16 %v732
        %v757 = vunpack.c.l.b16 %v733
        %v758 = vunpack.c.l.b16 %v734
        %v759 = vunpack.c.l.b16 %v735
        %v760 = vunpack.c.l.b16 %v736
        %v761 = vunpack.c.l.b16 %v737
        %v762 = vunpack.c.l.b16 %v738
        %v763 = vunpack.c.l.b16 %v739
        %v764 = vunpack.c.l.b16 %v740
        %v765 = vunpack.c.l.b16 %v741
        %v766 = vunpack.c.l.b16 %v742
        %v767 = vunpack.c.l.b16 %v743
        %vm768 = vcmask 1041409
        %v769 = vsel %vm768, %v745, %v744
        %vm770 = vcmask 1042434
        %v771 = vsel %vm770, %v746, %v769
        %vm772 = vcmask 1043459
        %v773 = vsel %vm772, %v747, %v771
        %vm774 = vcmask 1044484
        %v775 = vsel %vm774, %v748, %v773
        %vm776 = vcmask 1045509
        %v777 = vsel %vm776, %v749, %v775
        %vm778 = vcmask 1046534
        %v779 = vsel %vm778, %v750, %v777
        %vm780 = vcmask 1047559
        %v781 = vsel %vm780, %v751, %v779
        %v782 = vsel %vm768, %v753, %v752
        %v783 = vsel %vm770, %v754, %v782
        %v784 = vsel %vm772, %v755, %v783
        %v785 = vsel %vm774, %v756, %v784
        %v786 = vsel %vm776, %v757, %v785
        %v787 = vsel %vm778, %v758, %v786
        %v788 = vsel %vm780, %v759, %v787
        %v789 = vsel %vm768, %v761, %v760
        %v790 = vsel %vm770, %v762, %v789
        %v791 = vsel %vm772, %v763, %v790
        %v792 = vsel %vm774, %v764, %v791
        %v793 = vsel %vm776, %v765, %v792
        %v794 = vsel %vm778, %v766, %v793
        %v795 = vsel %vm780, %v767, %v794
        %v796 = vpack.c.b16 %v781, %v781
        %v797 = vpack.c.b16 %v788, %v788
        %v798 = vpack.c.b16 %v795, %v795
        %802 = vst [vmem:[%s191] sm:$0xf] %v796
        %803 = vst [vmem:[%s191 + $0x4] sm:$0xf] %v797
        %804 = vst [vmem:[%s191 + $0x8] sm:$0xf] %v798
        %s805 = sand.u32 %s115, 1
        %s806 = scalar_lea.sflag [#allocation3], %s805
        %s807 = sand.u32 %s115, 1
        %s808 = smul.addr %s807, 12
        %s809 = scalar_lea.vmem [#allocation2], %s808
        // Predicated region
        $region37: #{tpu_custom_call.1} parent=35 // pred_check
          %p810 = pneg %p125
        $region38: #{tpu_custom_call.1} parent=35 // pred_check_branch
          %812 = sbr.rel (%p810) target = $region40
        $region39: #{tpu_custom_call.1} parent=35 // pred_region
          %s813 = smul.u32 3, %s18
          %s815 = ssub.s32 192, 192
          %816 = vsyncadd %s806, %s815
          %s817 = smul.addr %s813, 64
          %s818 = scalar_lea.hbm %s4, %s817
          %s819 = sshll.u32 %s809, 4
          %s820 = int_to_ptr.vmem [resolvable:$true] %s819
          %825 = dma.vmem_to_hbm [thread:$0]  %s820, 192, %s818, %s806, 64, 64, 4
        $region40: #{tpu_custom_call.1} parent=35 // pred_fallthru
          _
      $region36: #{tpu_custom_call.1} parent=5 // pred_fallthru
        _
      %p826 = scmp.le.s32.totalorder 2, %s13
      // Predicated region
      $region41: #{tpu_custom_call.1} parent=5 // pred_check
        %p827 = pneg %p826
      $region42: #{tpu_custom_call.1} parent=5 // pred_check_branch
        %829 = sbr.rel (%p827) target = $region44
      $region43: #{tpu_custom_call.1} parent=5 // pred_region
        %s830 = ssub.s32 %s13, 2
        // Predicated region
        $region45: #{tpu_custom_call.1} parent=43 // pred_check
          %p831 = pneg %p131
        $region46: #{tpu_custom_call.1} parent=43 // pred_check_branch
          %833 = sbr.rel (%p831) target = $region48
        $region47: #{tpu_custom_call.1} parent=43 // pred_region
          %s834 = sand.u32 %s116, 1
          %s835 = scalar_lea.sflag [#allocation3], %s834
          %s836 = sand.u32 %s116, 1
          %s837 = smul.addr %s836, 12
          %s838 = scalar_lea.vmem [#allocation2], %s837
          %839 = dma.done %s835, 192
        $region48: #{tpu_custom_call.1} parent=43 // pred_fallthru
          _
      $region44: #{tpu_custom_call.1} parent=5 // pred_fallthru
        _
    $region6: #{tpu_custom_call.1} parent=1 // loop_footer
      %s17 = sadd.s32 1, %s13
    $region7: #{tpu_custom_call.1} parent=1 // loop_footer_branch
      %12 = sbr.rel target = $region3
    $region8: #{tpu_custom_call.1} parent=1 // loop_exit
      _
    %840 = vsyncpa [#allocation3], 1
    %s841 = scalar_lea.sflag [#allocation3], 1
    %842 = vsyncpa %s841, 1

</llo_original>
